<compile_context>
chip_gen: v5e
topology: v5e:2x2
jax: 0.10.0
libtpu: 0.0.40
codegen_flags: <defaults>
</compile_context>

<pallas_src>
import functools

import numpy as np
import jax
import jax.numpy as jnp
from jax import lax
from jax.experimental import pallas as pl
from jax.experimental.pallas import tpu as pltpu


def _distance_kernel(pos_ref, post_ref, bcol_ref, brow_ref, tri_ref,
                     out_ref, cnt_ref,
                     *, cutoff_lower, cutoff_upper, loop, cap):
    """Pairwise distances + all masking fused, one (tm, tn) tile per step."""
    i = pl.program_id(0)          # target tile
    j = pl.program_id(1)          # source tile (sequential / "arbitrary")
    tm, tn = out_ref.shape

    @pl.when(j == 0)
    def _():
        cnt_ref[...] = jnp.zeros_like(cnt_ref)

    px = pos_ref[...]             # (tm, 8)  target xyz in cols 0..2
    pt = post_ref[...]            # (8, tn)  source xyz in rows 0..2

    # Exact per-component form (no catastrophic cancellation near d ~ 0).
    dx = px[:, 0:1] - pt[0:1, :]
    dy = px[:, 1:2] - pt[1:2, :]
    dz = px[:, 2:3] - pt[2:3, :]
    dist = jnp.sqrt(dx * dx + dy * dy + dz * dz)            # (tm, tn) f32

    # Padded nodes carry batch -1 (cols) / -2 (rows) so they never match.
    same_batch = bcol_ref[...] == brow_ref[...]              # (tm, tn) bool

    tt = i * tm + lax.broadcasted_iota(jnp.int32, (tm, tn), 0)   # target idx
    ss = j * tn + lax.broadcasted_iota(jnp.int32, (tm, tn), 1)   # source idx
    is_self = tt == ss

    # TODO(synk): torch_cluster's exact boundary convention at d == r (< vs <=)
    # and its tie-breaking when more than `cap` neighbors exist are
    # approximated here by <= and "first by source index".
    adj = same_batch & (dist <= cutoff_upper)
    if not loop:
        adj = adj & jnp.logical_not(is_self)

    # Per-target neighbor cap, carried across source tiles via cnt scratch.
    # rank = prefix count from previous tiles + in-tile inclusive prefix sum,
    # computed on the MXU with an upper-triangular ones matrix (exact).
    adj_f = adj.astype(jnp.float32)
    adj_b = adj_f.astype(jnp.bfloat16)
    rank = cnt_ref[...] + jnp.dot(adj_b, tri_ref[...],
                                  preferred_element_type=jnp.float32)
    keep = adj & (rank <= float(cap))
    cnt_ref[...] = cnt_ref[...] + jnp.sum(adj_f, axis=1, keepdims=True)

    # Lower-cutoff filter; self-loops (if requested) are always kept, w = 0.
    if loop:
        keep = keep & ((dist >= cutoff_lower) | is_self)
        w = jnp.where(is_self, 0.0, dist)
    else:
        keep = keep & (dist >= cutoff_lower)
        w = dist

    out_ref[...] = jnp.where(keep, w, -1.0)


def _pick_tile(npad, pref):
    """Largest multiple of 128 <= pref that divides npad (npad % 128 == 0)."""
    t = min(pref, npad)
    while npad % t:
        t -= 128
    return max(t, 128)


def _pairwise_distance(pos_p, pos_t, batch_col, batch_row, tri,
                       *, cutoff_lower, cutoff_upper, loop, cap, tm, tn):
    npad = pos_p.shape[0]
    kernel = functools.partial(_distance_kernel,
                               cutoff_lower=float(cutoff_lower),
                               cutoff_upper=float(cutoff_upper),
                               loop=bool(loop), cap=int(cap))
    return pl.pallas_call(
        kernel,
        out_shape=jax.ShapeDtypeStruct((npad, npad), jnp.float32),
        grid_spec=pltpu.PrefetchScalarGridSpec(
            num_scalar_prefetch=0,
            grid=(npad // tm, npad // tn),
            in_specs=[
                pl.BlockSpec((tm, 8), lambda i, j: (i, 0)),    # pos rows
                pl.BlockSpec((8, tn), lambda i, j: (0, j)),    # pos cols (pre-T)
                pl.BlockSpec((tm, 1), lambda i, j: (i, 0)),    # batch (col)
                pl.BlockSpec((1, tn), lambda i, j: (0, j)),    # batch (row)
                pl.BlockSpec((tn, tn), lambda i, j: (0, 0)),   # triangular ones
            ],
            out_specs=pl.BlockSpec((tm, tn), lambda i, j: (i, j)),
            scratch_shapes=[pltpu.VMEM((tm, 1), jnp.float32)]),
        compiler_params=pltpu.CompilerParams(
            dimension_semantics=("parallel", "arbitrary")),
    )(pos_p, pos_t, batch_col, batch_row, tri)


class Distance:
    """JAX/Pallas re-implementation of matdeeplearn Distance.

    TPU kernels need static shapes, so edges are returned padded to
    E_max = N * (max_num_neighbors + 1); padded slots hold edge_index == -1
    and edge_weight == 0.  An extra `num_edges` scalar is returned.
    edge_index is int32 (PyTorch uses int64).
    The reference module's "missed atoms" assert requires a host sync, so it
    is gated behind `check_neighbors` (default off to keep the call jittable).
    """

    def __init__(self, cutoff_lower, cutoff_upper, max_num_neighbors=32,
                 return_vecs=False, loop=False, check_neighbors=False,
                 tile_m=None, tile_n=None):
        self.cutoff_lower = float(cutoff_lower)
        self.cutoff_upper = float(cutoff_upper)
        self.max_num_neighbors = int(max_num_neighbors)
        self.return_vecs = bool(return_vecs)
        self.loop = bool(loop)
        self.check_neighbors = bool(check_neighbors)
        self.tile_m = tile_m
        self.tile_n = tile_n

    def __call__(self, pos, batch):
        pos = jnp.asarray(pos, jnp.float32)
        batch = jnp.asarray(batch, jnp.int32)
        n = pos.shape[0]
        npad = int(-(-max(n, 128) // 128) * 128)        # multiple of 128
        tm = self.tile_m or _pick_tile(npad, 256)
        tn = self.tile_n or _pick_tile(npad, 512)

        pos_p = jnp.zeros((npad, 8), jnp.float32).at[:n, :3].set(pos)
        pos_t = jnp.zeros((8, npad), jnp.float32).at[:3, :n].set(pos.T)
        batch_col = jnp.full((npad, 1), -1, jnp.int32).at[:n, 0].set(batch)
        batch_row = jnp.full((1, npad), -2, jnp.int32).at[0, :n].set(batch)
        tri = jnp.asarray(np.triu(np.ones((tn, tn), np.float32)), jnp.bfloat16)

        cap = self.max_num_neighbors + 1                # radius_graph(max+1)
        wmat = _pairwise_distance(
            pos_p, pos_t, batch_col, batch_row, tri,
            cutoff_lower=self.cutoff_lower, cutoff_upper=self.cutoff_upper,
            loop=self.loop, cap=cap, tm=tm, tn=tn)       # [target, source]

        keep = wmat >= 0.0

        if self.check_neighbors:
            # TODO(synk): reference asserts on pre-lower-cutoff counts; this
            # checks the post-filter counts (host-syncing, hence gated).
            counts = np.asarray(jnp.sum(keep, axis=1))[:n]
            assert not (counts > self.max_num_neighbors).any(), (
                "The neighbor search missed some atoms due to "
                "max_num_neighbors being too low.")

        # Fixed-size edge extraction, ordered by target then source
        # (matches radius_graph 'source_to_target' output ordering).
        e_max = n * cap
        flat_keep = keep.reshape(-1)
        sentinel = npad * npad
        (idx,) = jnp.nonzero(flat_keep, size=e_max, fill_value=sentinel)
        valid_e = idx < sentinel
        safe = jnp.minimum(idx, sentinel - 1)
        t = safe // npad
        s = safe % npad

        edge_index = jnp.stack([jnp.where(valid_e, s, -1),
                                jnp.where(valid_e, t, -1)]).astype(jnp.int32)
        edge_weight = jnp.where(valid_e, wmat.reshape(-1)[safe], 0.0)
        num_edges = jnp.sum(valid_e.astype(jnp.int32))

        if self.return_vecs:
            pos_pad = pos_p[:, :3]
            edge_vec = jnp.where(valid_e[:, None],
                                 pos_pad[s] - pos_pad[t], 0.0)
            return edge_index, edge_weight, edge_vec, num_edges
        return edge_index, edge_weight, None, num_edges


def _numpy_reference(pos_np, batch_np, cutoff_lower, cutoff_upper,
                     max_num_neighbors, loop):
    """Target-major radius graph with first-by-index neighbor cap."""
    n = pos_np.shape[0]
    cap = max_num_neighbors + 1
    ref = []
    for t_ in range(n):
        nbrs = []
        for s_ in range(n):
            if batch_np[s_] != batch_np[t_]:
                continue
            if (not loop) and s_ == t_:
                continue
            d = float(np.linalg.norm(pos_np[t_].astype(np.float64)
                                     - pos_np[s_].astype(np.float64)))
            if d <= cutoff_upper:
                nbrs.append((s_, d))
        nbrs = nbrs[:cap]
        for s_, d in nbrs:
            if loop and s_ == t_:
                ref.append((s_, t_, 0.0))
            elif d >= cutoff_lower:
                ref.append((s_, t_, d))
    return ref


def _run_and_check(module, pos, batch):
    edge_index, edge_weight, edge_vec, num_edges = module(pos, batch)
    jax.block_until_ready((edge_index, edge_weight, num_edges))

    pos_np, batch_np = np.asarray(pos), np.asarray(batch)
    ref = _numpy_reference(pos_np, batch_np, module.cutoff_lower,
                           module.cutoff_upper, module.max_num_neighbors,
                           module.loop)
    ne = int(num_edges)
    assert ne == len(ref), (ne, len(ref))
    for k, (rs, rt, rw) in enumerate(ref):
        assert int(edge_index[0, k]) == rs
        assert int(edge_index[1, k]) == rt
        assert abs(float(edge_weight[k]) - rw) < 1e-4
        if edge_vec is not None:
            ev_ref = pos_np[rs] - pos_np[rt]
            assert np.allclose(np.asarray(edge_vec[k]), ev_ref, atol=1e-5)


if __name__ == "__main__":
    key = jax.random.PRNGKey(0)
    k1, k2 = jax.random.split(key)

    # Test 1: small system, single-tile grid, loop=False, neighbor check on.
    n1 = 16
    pos1 = jax.random.uniform(k1, (n1, 3), jnp.float32, minval=0.0, maxval=3.0)
    batch1 = jnp.array([0] * 8 + [1] * 8, jnp.int32)
    mod1 = Distance(0.0, 1.5, max_num_neighbors=32, return_vecs=True,
                    loop=False, check_neighbors=True)
    _run_and_check(mod1, pos1, batch1)

    # Test 2: 2x2 tile grid (forced 128x128 tiles), loop=True, lower cutoff,
    # neighbor cap actually triggers for some atoms.
    n2 = 200
    pos2 = jax.random.uniform(k2, (n2, 3), jnp.float32, minval=0.0, maxval=6.0)
    batch2 = jnp.array([0] * 100 + [1] * 100, jnp.int32)
    mod2 = Distance(0.5, 1.8, max_num_neighbors=16, return_vecs=True,
                    loop=True, tile_m=128, tile_n=128)
    _run_and_check(mod2, pos2, batch2)

    print("KERNEL_OK")
</pallas_src>

<mosaic_0001>
module attributes {stable_mosaic.version = 11 : i64} {
  func.func @_distance_kernel(%arg0: i32, %arg1: i32, %arg2: memref<128x8xf32, #tpu.memory_space<vmem>>, %arg3: memref<8x128xf32, #tpu.memory_space<vmem>>, %arg4: memref<128x1xi32, #tpu.memory_space<vmem>>, %arg5: memref<1x128xi32, #tpu.memory_space<vmem>>, %arg6: memref<128x128xbf16, #tpu.memory_space<vmem>>, %arg7: memref<128x128xf32, #tpu.memory_space<vmem>>, %arg8: memref<128x1xf32, #tpu.memory_space<vmem>>) attributes {dimension_semantics = [#tpu.dimension_semantics<parallel>, #tpu.dimension_semantics<arbitrary>], iteration_bounds = array<i64: 1, 1>, scalar_prefetch = 0 : i64, scratch_operands = 1 : i64, tpu.core_type = #tpu.core_type<tc>, window_params = [{transform_indices = @transform_0, window_bounds = array<i64: 128, 8>}, {transform_indices = @transform_1, window_bounds = array<i64: 8, 128>}, {transform_indices = @transform_2, window_bounds = array<i64: 128, 1>}, {transform_indices = @transform_3, window_bounds = array<i64: 1, 128>}, {pipeline_mode = #tpu.pipeline_mode<synchronous>, transform_indices = @transform_4, window_bounds = array<i64: 128, 128>}, {transform_indices = @transform_5, window_bounds = array<i64: 128, 128>}]} {
    %c0_i32 = arith.constant 0 : i32
    %0 = arith.cmpi eq, %arg1, %c0_i32 : i32
    %1 = arith.extui %0 : i1 to i32
    %c0_i32_0 = arith.constant 0 : i32
    %2 = arith.cmpi ne, %1, %c0_i32_0 : i32
    scf.if %2 {
      %cst_25 = arith.constant 0.000000e+00 : f32
      %67 = vector.broadcast %cst_25 : f32 to vector<128x1xf32>
      %c0_26 = arith.constant 0 : index
      %c0_27 = arith.constant 0 : index
      %68 = vector.load %arg8[%c0_26, %c0_27] : memref<128x1xf32, #tpu.memory_space<vmem>>, vector<128x1xf32>
      tpu.vector_store %arg8[%c0_26, %c0_27], %67 {strides = array<i32>} : memref<128x1xf32, #tpu.memory_space<vmem>>, vector<128x1xf32>,
    } else {
    }
    %c0 = arith.constant 0 : index
    %c0_1 = arith.constant 0 : index
    %3 = vector.load %arg2[%c0, %c0_1] : memref<128x8xf32, #tpu.memory_space<vmem>>, vector<128x8xf32>
    %c0_2 = arith.constant 0 : index
    %c0_3 = arith.constant 0 : index
    %4 = vector.load %arg3[%c0_2, %c0_3] : memref<8x128xf32, #tpu.memory_space<vmem>>, vector<8x128xf32>
    %5 = vector.extract_strided_slice %3 {offsets = [0, 0], sizes = [128, 1], strides = [1, 1]} : vector<128x8xf32> to vector<128x1xf32>
    %6 = vector.extract_strided_slice %4 {offsets = [0, 0], sizes = [1, 128], strides = [1, 1]} : vector<8x128xf32> to vector<1x128xf32>
    %7 = vector.broadcast %5 : vector<128x1xf32> to vector<128x128xf32>
    %8 = vector.broadcast %6 : vector<1x128xf32> to vector<128x128xf32>
    %9 = arith.subf %7, %8 : vector<128x128xf32>
    %10 = vector.extract_strided_slice %3 {offsets = [0, 1], sizes = [128, 1], strides = [1, 1]} : vector<128x8xf32> to vector<128x1xf32>
    %11 = vector.extract_strided_slice %4 {offsets = [1, 0], sizes = [1, 128], strides = [1, 1]} : vector<8x128xf32> to vector<1x128xf32>
    %12 = vector.broadcast %10 : vector<128x1xf32> to vector<128x128xf32>
    %13 = vector.broadcast %11 : vector<1x128xf32> to vector<128x128xf32>
    %14 = arith.subf %12, %13 : vector<128x128xf32>
    %15 = vector.extract_strided_slice %3 {offsets = [0, 2], sizes = [128, 1], strides = [1, 1]} : vector<128x8xf32> to vector<128x1xf32>
    %16 = vector.extract_strided_slice %4 {offsets = [2, 0], sizes = [1, 128], strides = [1, 1]} : vector<8x128xf32> to vector<1x128xf32>
    %17 = vector.broadcast %15 : vector<128x1xf32> to vector<128x128xf32>
    %18 = vector.broadcast %16 : vector<1x128xf32> to vector<128x128xf32>
    %19 = arith.subf %17, %18 : vector<128x128xf32>
    %20 = arith.mulf %9, %9 : vector<128x128xf32>
    %21 = arith.mulf %14, %14 : vector<128x128xf32>
    %22 = arith.addf %20, %21 : vector<128x128xf32>
    %23 = arith.mulf %19, %19 : vector<128x128xf32>
    %24 = arith.addf %22, %23 : vector<128x128xf32>
    %25 = math.sqrt %24 : vector<128x128xf32>
    %c0_4 = arith.constant 0 : index
    %c0_5 = arith.constant 0 : index
    %26 = vector.load %arg4[%c0_4, %c0_5] : memref<128x1xi32, #tpu.memory_space<vmem>>, vector<128x1xi32>
    %c0_6 = arith.constant 0 : index
    %c0_7 = arith.constant 0 : index
    %27 = vector.load %arg5[%c0_6, %c0_7] : memref<1x128xi32, #tpu.memory_space<vmem>>, vector<1x128xi32>
    %28 = vector.broadcast %26 : vector<128x1xi32> to vector<128x128xi32>
    %29 = vector.broadcast %27 : vector<1x128xi32> to vector<128x128xi32>
    %30 = arith.cmpi eq, %28, %29 : vector<128x128xi32>
    %c128_i32 = arith.constant 128 : i32
    %31 = arith.muli %arg0, %c128_i32 : i32
    %32 = tpu.iota {dimensions = array<i32: 0>} : vector<128x128xi32>
    %33 = vector.broadcast %31 : i32 to vector<128x128xi32>
    %34 = arith.addi %33, %32 : vector<128x128xi32>
    %c128_i32_8 = arith.constant 128 : i32
    %35 = arith.muli %arg1, %c128_i32_8 : i32
    %36 = tpu.iota {dimensions = array<i32: 1>} : vector<128x128xi32>
    %37 = vector.broadcast %35 : i32 to vector<128x128xi32>
    %38 = arith.addi %37, %36 : vector<128x128xi32>
    %39 = arith.cmpi eq, %34, %38 : vector<128x128xi32>
    %cst = arith.constant 1.500000e+00 : f32
    %40 = vector.broadcast %cst : f32 to vector<128x128xf32>
    %41 = arith.cmpf ole, %25, %40 : vector<128x128xf32>
    %42 = arith.andi %30, %41 : vector<128x128xi1>
    %cst_9 = arith.constant dense<true> : vector<128x128xi1>
    %43 = arith.xori %39, %cst_9 : vector<128x128xi1>
    %44 = arith.andi %42, %43 : vector<128x128xi1>
    %45 = arith.extui %44 : vector<128x128xi1> to vector<128x128xi32>
    %46 = arith.sitofp %45 : vector<128x128xi32> to vector<128x128xf32>
    %47 = arith.truncf %46 : vector<128x128xf32> to vector<128x128xbf16>
    %c0_10 = arith.constant 0 : index
    %c0_11 = arith.constant 0 : index
    %48 = vector.load %arg8[%c0_10, %c0_11] : memref<128x1xf32, #tpu.memory_space<vmem>>, vector<128x1xf32>
    %c0_12 = arith.constant 0 : index
    %c0_13 = arith.constant 0 : index
    %49 = vector.load %arg6[%c0_12, %c0_13] : memref<128x128xbf16, #tpu.memory_space<vmem>>, vector<128x128xbf16>
    %cst_14 = arith.constant dense<0.000000e+00> : vector<128x128xf32>
    %50 = tpu.matmul %47, %49, %cst_14 {dimension_numbers = #tpu.dot_dimension_numbers<[1], [0], [0], [1], [0, 0, 1, 1], [], []>} : vector<128x128xbf16>, vector<128x128xbf16>, vector<128x128xf32> -> vector<128x128xf32>
    %51 = vector.broadcast %48 : vector<128x1xf32> to vector<128x128xf32>
    %52 = arith.addf %51, %50 : vector<128x128xf32>
    %cst_15 = arith.constant 3.300000e+01 : f32
    %53 = vector.broadcast %cst_15 : f32 to vector<128x128xf32>
    %54 = arith.cmpf ole, %52, %53 : vector<128x128xf32>
    %55 = arith.andi %44, %54 : vector<128x128xi1>
    %c0_16 = arith.constant 0 : index
    %c0_17 = arith.constant 0 : index
    %56 = vector.load %arg8[%c0_16, %c0_17] : memref<128x1xf32, #tpu.memory_space<vmem>>, vector<128x1xf32>
    %cst_18 = arith.constant dense<0.000000e+00> : vector<128xf32>
    %57 = vector.multi_reduction <add>, %46, %cst_18 [1] : vector<128x128xf32> to vector<128xf32>
    %58 = vector.shape_cast %57 : vector<128xf32> to vector<128x1xf32>
    %59 = arith.addf %56, %58 : vector<128x1xf32>
    %c0_19 = arith.constant 0 : index
    %c0_20 = arith.constant 0 : index
    %60 = vector.load %arg8[%c0_19, %c0_20] : memref<128x1xf32, #tpu.memory_space<vmem>>, vector<128x1xf32>
    tpu.vector_store %arg8[%c0_19, %c0_20], %59 {strides = array<i32>} : memref<128x1xf32, #tpu.memory_space<vmem>>, vector<128x1xf32>,
    %cst_21 = arith.constant 0.000000e+00 : f32
    %61 = vector.broadcast %cst_21 : f32 to vector<128x128xf32>
    %62 = arith.cmpf oge, %25, %61 : vector<128x128xf32>
    %63 = arith.andi %55, %62 : vector<128x128xi1>
    %cst_22 = arith.constant -1.000000e+00 : f32
    %64 = vector.broadcast %cst_22 : f32 to vector<128x128xf32>
    %65 = arith.select %63, %25, %64 : vector<128x128xi1>, vector<128x128xf32>
    %c0_23 = arith.constant 0 : index
    %c0_24 = arith.constant 0 : index
    %66 = vector.load %arg7[%c0_23, %c0_24] : memref<128x128xf32, #tpu.memory_space<vmem>>, vector<128x128xf32>
    tpu.vector_store %arg7[%c0_23, %c0_24], %65 {strides = array<i32>} : memref<128x128xf32, #tpu.memory_space<vmem>>, vector<128x128xf32>,
    return
  }
  func.func @transform_0(%arg0: i32, %arg1: i32) -> (i32, i32) {
    %c0_i32 = arith.constant 0 : i32
    %c0_i32_0 = arith.constant 0 : i32
    return %arg0, %c0_i32 : i32, i32
  }
  func.func @transform_1(%arg0: i32, %arg1: i32) -> (i32, i32) {
    %c0_i32 = arith.constant 0 : i32
    %c0_i32_0 = arith.constant 0 : i32
    return %c0_i32, %arg1 : i32, i32
  }
  func.func @transform_2(%arg0: i32, %arg1: i32) -> (i32, i32) {
    %c0_i32 = arith.constant 0 : i32
    %c0_i32_0 = arith.constant 0 : i32
    return %arg0, %c0_i32 : i32, i32
  }
  func.func @transform_3(%arg0: i32, %arg1: i32) -> (i32, i32) {
    %c0_i32 = arith.constant 0 : i32
    %c0_i32_0 = arith.constant 0 : i32
    return %c0_i32, %arg1 : i32, i32
  }
  func.func @transform_4(%arg0: i32, %arg1: i32) -> (i32, i32) {
    %c0_i32 = arith.constant 0 : i32
    %c0_i32_0 = arith.constant 0 : i32
    %c0_i32_1 = arith.constant 0 : i32
    return %c0_i32, %c0_i32_0 : i32, i32
  }
  func.func @transform_5(%arg0: i32, %arg1: i32) -> (i32, i32) {
    %c0_i32 = arith.constant 0 : i32
    return %arg0, %arg1 : i32, i32
  }
}

</mosaic_0001>

<llo_original>
// kernel: tpu_custom_call.1
$region0: #{tpu_custom_call.1}
  #allocation0 [shape = 'u32[]', space=smem, size = 0x4, offset = 0x4, fixed_abs, tag = 'smem constant byte address 0x4 - core index']
  #allocation1 [shape = 'u32[72,128]{1,0:T(1,128)}', space=vmem, size = 0x9000, scoped, tag = 'internal scratch']
  #allocation2 [shape = 'f32[128,1]{1,0:T(8,128)}', space=vmem, size = 0x10000, scoped, tag = 'scratch operand']
  %s0 = inlined_call_operand.vmem [shape: f32[128,8], index: 0, kind: input, shape index: {}]
  %s1 = inlined_call_operand.vmem [shape: f32[8,128], index: 1, kind: input, shape index: {}]
  %s2 = inlined_call_operand.vmem [shape: s32[128,1], index: 2, kind: input, shape index: {}]
  %s3 = inlined_call_operand.vmem [shape: s32[1,128], index: 3, kind: input, shape index: {}]
  %s4 = inlined_call_operand.vmem [shape: bf16[128,128], index: 4, kind: input, shape index: {}]
  %s5 = inlined_call_operand.hbm [shape: f32[128,128], index: 5, kind: output, shape index: {}]
  %s6 = sld [smem:[#allocation0]]
  $region34: #{tpu_custom_call.1} parent=0
    _
  %s8 = ssub.s32 1, %s6
  %s9 = scalar_select 0, %s8, %s6
  $region1: #{tpu_custom_call.1} parent=0
    #allocation3 [shape = 'u8[65536]{0}', space=vmem, size = 0x10000, scoped, tag = 'output window, operand 0, single buffered']
    #allocation4 [shape = 's32[1]{0}', space=sflag, size = 0x4, scoped, tag = 'scoped memory for tpu_custom_call.1']
    %10 = vsyncpa [#allocation4], 0
    // Predicated region
    $region2: #{tpu_custom_call.1} parent=1 // pred_check
      _
    $region3: #{tpu_custom_call.1} parent=1 // pred_check_branch
      %12 = sbr.rel (0) target = $region5
    $region4: #{tpu_custom_call.1} parent=1 // pred_region
      _
    $region5: #{tpu_custom_call.1} parent=1 // pred_fallthru
      _
    // Predicated region
    $region6: #{tpu_custom_call.1} parent=1 // pred_check
      _
    $region7: #{tpu_custom_call.1} parent=1 // pred_check_branch
      %14 = sbr.rel (0) target = $region9
    $region8: #{tpu_custom_call.1} parent=1 // pred_region
      _
    $region9: #{tpu_custom_call.1} parent=1 // pred_fallthru
      _
    // Predicated region
    $region10: #{tpu_custom_call.1} parent=1 // pred_check
      _
    $region11: #{tpu_custom_call.1} parent=1 // pred_check_branch
      %16 = sbr.rel (0) target = $region13
    $region12: #{tpu_custom_call.1} parent=1 // pred_region
      _
    $region13: #{tpu_custom_call.1} parent=1 // pred_fallthru
      _
    // Predicated region
    $region14: #{tpu_custom_call.1} parent=1 // pred_check
      _
    $region15: #{tpu_custom_call.1} parent=1 // pred_check_branch
      %18 = sbr.rel (0) target = $region17
    $region16: #{tpu_custom_call.1} parent=1 // pred_region
      _
    $region17: #{tpu_custom_call.1} parent=1 // pred_fallthru
      _
    // Predicated region
    $region18: #{tpu_custom_call.1} parent=1 // pred_check
      _
    $region19: #{tpu_custom_call.1} parent=1 // pred_check_branch
      %20 = sbr.rel (0) target = $region21
    $region20: #{tpu_custom_call.1} parent=1 // pred_region
      _
    $region21: #{tpu_custom_call.1} parent=1 // pred_fallthru
      _
    %p21 = scmp.eq.s32.totalorder 0, 0
    // Predicated region
    $region22: #{tpu_custom_call.1} parent=1 // pred_check
      %p22 = pneg %p21
    $region23: #{tpu_custom_call.1} parent=1 // pred_check_branch
      %24 = sbr.rel (%p22) target = $region25
    $region24: #{tpu_custom_call.1} parent=1 // pred_region
      %vm25 = vcmask 7168
      %26 = vst.msk [vmem:[#allocation2] sm:$0xff] %vm25, 0.0
      %27 = vst.msk [vmem:[#allocation2 + $0x8] sm:$0xff] %vm25, 0.0
      %28 = vst.msk [vmem:[#allocation2 + $0x10] sm:$0xff] %vm25, 0.0
      %29 = vst.msk [vmem:[#allocation2 + $0x18] sm:$0xff] %vm25, 0.0
      %30 = vst.msk [vmem:[#allocation2 + $0x20] sm:$0xff] %vm25, 0.0
      %31 = vst.msk [vmem:[#allocation2 + $0x28] sm:$0xff] %vm25, 0.0
      %32 = vst.msk [vmem:[#allocation2 + $0x30] sm:$0xff] %vm25, 0.0
      %33 = vst.msk [vmem:[#allocation2 + $0x38] sm:$0xff] %vm25, 0.0
      %34 = vst.msk [vmem:[#allocation2 + $0x40] sm:$0xff] %vm25, 0.0
      %35 = vst.msk [vmem:[#allocation2 + $0x48] sm:$0xff] %vm25, 0.0
      %36 = vst.msk [vmem:[#allocation2 + $0x50] sm:$0xff] %vm25, 0.0
      %37 = vst.msk [vmem:[#allocation2 + $0x58] sm:$0xff] %vm25, 0.0
      %38 = vst.msk [vmem:[#allocation2 + $0x60] sm:$0xff] %vm25, 0.0
      %39 = vst.msk [vmem:[#allocation2 + $0x68] sm:$0xff] %vm25, 0.0
      %40 = vst.msk [vmem:[#allocation2 + $0x70] sm:$0xff] %vm25, 0.0
      %41 = vst.msk [vmem:[#allocation2 + $0x78] sm:$0xff] %vm25, 0.0
    $region25: #{tpu_custom_call.1} parent=1 // pred_fallthru
      _
    %v42 = vld [vmem:[%s0] sm:$0xff]
    %v43 = vld [vmem:[%s0 + $0x8] sm:$0xff]
    %v44 = vld [vmem:[%s0 + $0x10] sm:$0xff]
    %v45 = vld [vmem:[%s0 + $0x18] sm:$0xff]
    %v46 = vld [vmem:[%s0 + $0x20] sm:$0xff]
    %v47 = vld [vmem:[%s0 + $0x28] sm:$0xff]
    %v48 = vld [vmem:[%s0 + $0x30] sm:$0xff]
    %v49 = vld [vmem:[%s0 + $0x38] sm:$0xff]
    %v50 = vld [vmem:[%s0 + $0x40] sm:$0xff]
    %v51 = vld [vmem:[%s0 + $0x48] sm:$0xff]
    %v52 = vld [vmem:[%s0 + $0x50] sm:$0xff]
    %v53 = vld [vmem:[%s0 + $0x58] sm:$0xff]
    %v54 = vld [vmem:[%s0 + $0x60] sm:$0xff]
    %v55 = vld [vmem:[%s0 + $0x68] sm:$0xff]
    %v56 = vld [vmem:[%s0 + $0x70] sm:$0xff]
    %v57 = vld [vmem:[%s0 + $0x78] sm:$0xff]
    %v58 = vld [vmem:[%s1] sm:$0xff]
    %60 = vset.pattern.permute.xlu0 0
    %61 = vperm.xlu0 %60, %v42
    %v62 = vpop.permute.xlu0 %61
    %65 = vset.pattern.permute.xlu0 0
    %66 = vperm.xlu0 %65, %v43
    %v67 = vpop.permute.xlu0 %66
    %70 = vset.pattern.permute.xlu0 0
    %71 = vperm.xlu0 %70, %v44
    %v72 = vpop.permute.xlu0 %71
    %75 = vset.pattern.permute.xlu0 0
    %76 = vperm.xlu0 %75, %v45
    %v77 = vpop.permute.xlu0 %76
    %80 = vset.pattern.permute.xlu0 0
    %81 = vperm.xlu0 %80, %v46
    %v82 = vpop.permute.xlu0 %81
    %85 = vset.pattern.permute.xlu0 0
    %86 = vperm.xlu0 %85, %v47
    %v87 = vpop.permute.xlu0 %86
    %90 = vset.pattern.permute.xlu0 0
    %91 = vperm.xlu0 %90, %v48
    %v92 = vpop.permute.xlu0 %91
    %95 = vset.pattern.permute.xlu0 0
    %96 = vperm.xlu0 %95, %v49
    %v97 = vpop.permute.xlu0 %96
    %100 = vset.pattern.permute.xlu0 0
    %101 = vperm.xlu0 %100, %v50
    %v102 = vpop.permute.xlu0 %101
    %105 = vset.pattern.permute.xlu0 0
    %106 = vperm.xlu0 %105, %v51
    %v107 = vpop.permute.xlu0 %106
    %110 = vset.pattern.permute.xlu0 0
    %111 = vperm.xlu0 %110, %v52
    %v112 = vpop.permute.xlu0 %111
    %115 = vset.pattern.permute.xlu0 0
    %116 = vperm.xlu0 %115, %v53
    %v117 = vpop.permute.xlu0 %116
    %120 = vset.pattern.permute.xlu0 0
    %121 = vperm.xlu0 %120, %v54
    %v122 = vpop.permute.xlu0 %121
    %125 = vset.pattern.permute.xlu0 0
    %126 = vperm.xlu0 %125, %v55
    %v127 = vpop.permute.xlu0 %126
    %130 = vset.pattern.permute.xlu0 0
    %131 = vperm.xlu0 %130, %v56
    %v132 = vpop.permute.xlu0 %131
    %135 = vset.pattern.permute.xlu0 0
    %136 = vperm.xlu0 %135, %v57
    %v137 = vpop.permute.xlu0 %136
    %v139 = vperm.slane %v58, 0
    %v140 = vsub.f32 %v62, %v139
    %v141 = vsub.f32 %v67, %v139
    %v142 = vsub.f32 %v72, %v139
    %v143 = vsub.f32 %v77, %v139
    %v144 = vsub.f32 %v82, %v139
    %v145 = vsub.f32 %v87, %v139
    %v146 = vsub.f32 %v92, %v139
    %v147 = vsub.f32 %v97, %v139
    %v148 = vsub.f32 %v102, %v139
    %v149 = vsub.f32 %v107, %v139
    %v150 = vsub.f32 %v112, %v139
    %v151 = vsub.f32 %v117, %v139
    %v152 = vsub.f32 %v122, %v139
    %v153 = vsub.f32 %v127, %v139
    %v154 = vsub.f32 %v132, %v139
    %v155 = vsub.f32 %v137, %v139
    %156 = vset.pattern.permute.xlu0 1
    %157 = vperm.xlu0 %156, %v42
    %v158 = vpop.permute.xlu0 %157
    %160 = vset.pattern.permute.xlu0 1
    %161 = vperm.xlu0 %160, %v43
    %v162 = vpop.permute.xlu0 %161
    %164 = vset.pattern.permute.xlu0 1
    %165 = vperm.xlu0 %164, %v44
    %v166 = vpop.permute.xlu0 %165
    %168 = vset.pattern.permute.xlu0 1
    %169 = vperm.xlu0 %168, %v45
    %v170 = vpop.permute.xlu0 %169
    %172 = vset.pattern.permute.xlu0 1
    %173 = vperm.xlu0 %172, %v46
    %v174 = vpop.permute.xlu0 %173
    %176 = vset.pattern.permute.xlu0 1
    %177 = vperm.xlu0 %176, %v47
    %v178 = vpop.permute.xlu0 %177
    %180 = vset.pattern.permute.xlu0 1
    %181 = vperm.xlu0 %180, %v48
    %v182 = vpop.permute.xlu0 %181
    %184 = vset.pattern.permute.xlu0 1
    %185 = vperm.xlu0 %184, %v49
    %v186 = vpop.permute.xlu0 %185
    %188 = vset.pattern.permute.xlu0 1
    %189 = vperm.xlu0 %188, %v50
    %v190 = vpop.permute.xlu0 %189
    %192 = vset.pattern.permute.xlu0 1
    %193 = vperm.xlu0 %192, %v51
    %v194 = vpop.permute.xlu0 %193
    %196 = vset.pattern.permute.xlu0 1
    %197 = vperm.xlu0 %196, %v52
    %v198 = vpop.permute.xlu0 %197
    %200 = vset.pattern.permute.xlu0 1
    %201 = vperm.xlu0 %200, %v53
    %v202 = vpop.permute.xlu0 %201
    %204 = vset.pattern.permute.xlu0 1
    %205 = vperm.xlu0 %204, %v54
    %v206 = vpop.permute.xlu0 %205
    %208 = vset.pattern.permute.xlu0 1
    %209 = vperm.xlu0 %208, %v55
    %v210 = vpop.permute.xlu0 %209
    %212 = vset.pattern.permute.xlu0 1
    %213 = vperm.xlu0 %212, %v56
    %v214 = vpop.permute.xlu0 %213
    %216 = vset.pattern.permute.xlu0 1
    %217 = vperm.xlu0 %216, %v57
    %v218 = vpop.permute.xlu0 %217
    %v220 = vperm.slane %v58, 1
    %v221 = vsub.f32 %v158, %v220
    %v222 = vsub.f32 %v162, %v220
    %v223 = vsub.f32 %v166, %v220
    %v224 = vsub.f32 %v170, %v220
    %v225 = vsub.f32 %v174, %v220
    %v226 = vsub.f32 %v178, %v220
    %v227 = vsub.f32 %v182, %v220
    %v228 = vsub.f32 %v186, %v220
    %v229 = vsub.f32 %v190, %v220
    %v230 = vsub.f32 %v194, %v220
    %v231 = vsub.f32 %v198, %v220
    %v232 = vsub.f32 %v202, %v220
    %v233 = vsub.f32 %v206, %v220
    %v234 = vsub.f32 %v210, %v220
    %v235 = vsub.f32 %v214, %v220
    %v236 = vsub.f32 %v218, %v220
    %237 = vset.pattern.permute.xlu0 2
    %238 = vperm.xlu0 %237, %v42
    %v239 = vpop.permute.xlu0 %238
    %241 = vset.pattern.permute.xlu0 2
    %242 = vperm.xlu0 %241, %v43
    %v243 = vpop.permute.xlu0 %242
    %245 = vset.pattern.permute.xlu0 2
    %246 = vperm.xlu0 %245, %v44
    %v247 = vpop.permute.xlu0 %246
    %249 = vset.pattern.permute.xlu0 2
    %250 = vperm.xlu0 %249, %v45
    %v251 = vpop.permute.xlu0 %250
    %253 = vset.pattern.permute.xlu0 2
    %254 = vperm.xlu0 %253, %v46
    %v255 = vpop.permute.xlu0 %254
    %257 = vset.pattern.permute.xlu0 2
    %258 = vperm.xlu0 %257, %v47
    %v259 = vpop.permute.xlu0 %258
    %261 = vset.pattern.permute.xlu0 2
    %262 = vperm.xlu0 %261, %v48
    %v263 = vpop.permute.xlu0 %262
    %265 = vset.pattern.permute.xlu0 2
    %266 = vperm.xlu0 %265, %v49
    %v267 = vpop.permute.xlu0 %266
    %269 = vset.pattern.permute.xlu0 2
    %270 = vperm.xlu0 %269, %v50
    %v271 = vpop.permute.xlu0 %270
    %273 = vset.pattern.permute.xlu0 2
    %274 = vperm.xlu0 %273, %v51
    %v275 = vpop.permute.xlu0 %274
    %277 = vset.pattern.permute.xlu0 2
    %278 = vperm.xlu0 %277, %v52
    %v279 = vpop.permute.xlu0 %278
    %281 = vset.pattern.permute.xlu0 2
    %282 = vperm.xlu0 %281, %v53
    %v283 = vpop.permute.xlu0 %282
    %285 = vset.pattern.permute.xlu0 2
    %286 = vperm.xlu0 %285, %v54
    %v287 = vpop.permute.xlu0 %286
    %289 = vset.pattern.permute.xlu0 2
    %290 = vperm.xlu0 %289, %v55
    %v291 = vpop.permute.xlu0 %290
    %293 = vset.pattern.permute.xlu0 2
    %294 = vperm.xlu0 %293, %v56
    %v295 = vpop.permute.xlu0 %294
    %297 = vset.pattern.permute.xlu0 2
    %298 = vperm.xlu0 %297, %v57
    %v299 = vpop.permute.xlu0 %298
    %v301 = vperm.slane %v58, 2
    %v302 = vsub.f32 %v239, %v301
    %v303 = vsub.f32 %v243, %v301
    %v304 = vsub.f32 %v247, %v301
    %v305 = vsub.f32 %v251, %v301
    %v306 = vsub.f32 %v255, %v301
    %v307 = vsub.f32 %v259, %v301
    %v308 = vsub.f32 %v263, %v301
    %v309 = vsub.f32 %v267, %v301
    %v310 = vsub.f32 %v271, %v301
    %v311 = vsub.f32 %v275, %v301
    %v312 = vsub.f32 %v279, %v301
    %v313 = vsub.f32 %v283, %v301
    %v314 = vsub.f32 %v287, %v301
    %v315 = vsub.f32 %v291, %v301
    %v316 = vsub.f32 %v295, %v301
    %v317 = vsub.f32 %v299, %v301
    %v318 = vmul.f32 %v140, %v140
    %v319 = vmul.f32 %v141, %v141
    %v320 = vmul.f32 %v142, %v142
    %v321 = vmul.f32 %v143, %v143
    %v322 = vmul.f32 %v144, %v144
    %v323 = vmul.f32 %v145, %v145
    %v324 = vmul.f32 %v146, %v146
    %v325 = vmul.f32 %v147, %v147
    %v326 = vmul.f32 %v148, %v148
    %v327 = vmul.f32 %v149, %v149
    %v328 = vmul.f32 %v150, %v150
    %v329 = vmul.f32 %v151, %v151
    %v330 = vmul.f32 %v152, %v152
    %v331 = vmul.f32 %v153, %v153
    %v332 = vmul.f32 %v154, %v154
    %v333 = vmul.f32 %v155, %v155
    %v334 = vmul.f32 %v221, %v221
    %v335 = vmul.f32 %v222, %v222
    %v336 = vmul.f32 %v223, %v223
    %v337 = vmul.f32 %v224, %v224
    %v338 = vmul.f32 %v225, %v225
    %v339 = vmul.f32 %v226, %v226
    %v340 = vmul.f32 %v227, %v227
    %v341 = vmul.f32 %v228, %v228
    %v342 = vmul.f32 %v229, %v229
    %v343 = vmul.f32 %v230, %v230
    %v344 = vmul.f32 %v231, %v231
    %v345 = vmul.f32 %v232, %v232
    %v346 = vmul.f32 %v233, %v233
    %v347 = vmul.f32 %v234, %v234
    %v348 = vmul.f32 %v235, %v235
    %v349 = vmul.f32 %v236, %v236
    %v350 = vadd.f32 %v318, %v334
    %v351 = vadd.f32 %v319, %v335
    %v352 = vadd.f32 %v320, %v336
    %v353 = vadd.f32 %v321, %v337
    %v354 = vadd.f32 %v322, %v338
    %v355 = vadd.f32 %v323, %v339
    %v356 = vadd.f32 %v324, %v340
    %v357 = vadd.f32 %v325, %v341
    %v358 = vadd.f32 %v326, %v342
    %v359 = vadd.f32 %v327, %v343
    %v360 = vadd.f32 %v328, %v344
    %v361 = vadd.f32 %v329, %v345
    %v362 = vadd.f32 %v330, %v346
    %v363 = vadd.f32 %v331, %v347
    %v364 = vadd.f32 %v332, %v348
    %v365 = vadd.f32 %v333, %v349
    %v366 = vmul.f32 %v302, %v302
    %v367 = vmul.f32 %v303, %v303
    %v368 = vmul.f32 %v304, %v304
    %v369 = vmul.f32 %v305, %v305
    %v370 = vmul.f32 %v306, %v306
    %v371 = vmul.f32 %v307, %v307
    %v372 = vmul.f32 %v308, %v308
    %v373 = vmul.f32 %v309, %v309
    %v374 = vmul.f32 %v310, %v310
    %v375 = vmul.f32 %v311, %v311
    %v376 = vmul.f32 %v312, %v312
    %v377 = vmul.f32 %v313, %v313
    %v378 = vmul.f32 %v314, %v314
    %v379 = vmul.f32 %v315, %v315
    %v380 = vmul.f32 %v316, %v316
    %v381 = vmul.f32 %v317, %v317
    %v382 = vadd.f32 %v350, %v366
    %v383 = vadd.f32 %v351, %v367
    %v384 = vadd.f32 %v352, %v368
    %v385 = vadd.f32 %v353, %v369
    %v386 = vadd.f32 %v354, %v370
    %v387 = vadd.f32 %v355, %v371
    %v388 = vadd.f32 %v356, %v372
    %v389 = vadd.f32 %v357, %v373
    %v390 = vadd.f32 %v358, %v374
    %v391 = vadd.f32 %v359, %v375
    %v392 = vadd.f32 %v360, %v376
    %v393 = vadd.f32 %v361, %v377
    %v394 = vadd.f32 %v362, %v378
    %v395 = vadd.f32 %v363, %v379
    %v396 = vadd.f32 %v364, %v380
    %v397 = vadd.f32 %v365, %v381
    %v398 = vrsqrt.pop %v382
    %v399 = vmul.f32 %v398, %v382
    %v400 = vmul.f32 %v399, %v398
    %v401 = vmul.f32 0.5, %v400
    %v402 = vsub.f32 1.5, %v401
    %v403 = vmul.f32 %v398, %v402
    %v404 = vmul.f32 %v382, %v403
    %vm405 = vcmp.eq.f32.partialorder %v382, inf
    %v406 = vsel %vm405, %v382, %v404
    %vm407 = vcmp.eq.f32.partialorder %v382, 0.0
    %v408 = vand.u32 %v382, 2147483648
    %v409 = vsel %vm407, %v408, %v406
    %v410 = vrsqrt.pop %v383
    %v411 = vmul.f32 %v410, %v383
    %v412 = vmul.f32 %v411, %v410
    %v413 = vmul.f32 0.5, %v412
    %v414 = vsub.f32 1.5, %v413
    %v415 = vmul.f32 %v410, %v414
    %v416 = vmul.f32 %v383, %v415
    %vm417 = vcmp.eq.f32.partialorder %v383, inf
    %v418 = vsel %vm417, %v383, %v416
    %vm419 = vcmp.eq.f32.partialorder %v383, 0.0
    %v420 = vand.u32 %v383, 2147483648
    %v421 = vsel %vm419, %v420, %v418
    %v422 = vrsqrt.pop %v384
    %v423 = vmul.f32 %v422, %v384
    %v424 = vmul.f32 %v423, %v422
    %v425 = vmul.f32 0.5, %v424
    %v426 = vsub.f32 1.5, %v425
    %v427 = vmul.f32 %v422, %v426
    %v428 = vmul.f32 %v384, %v427
    %vm429 = vcmp.eq.f32.partialorder %v384, inf
    %v430 = vsel %vm429, %v384, %v428
    %vm431 = vcmp.eq.f32.partialorder %v384, 0.0
    %v432 = vand.u32 %v384, 2147483648
    %v433 = vsel %vm431, %v432, %v430
    %v434 = vrsqrt.pop %v385
    %v435 = vmul.f32 %v434, %v385
    %v436 = vmul.f32 %v435, %v434
    %v437 = vmul.f32 0.5, %v436
    %v438 = vsub.f32 1.5, %v437
    %v439 = vmul.f32 %v434, %v438
    %v440 = vmul.f32 %v385, %v439
    %vm441 = vcmp.eq.f32.partialorder %v385, inf
    %v442 = vsel %vm441, %v385, %v440
    %vm443 = vcmp.eq.f32.partialorder %v385, 0.0
    %v444 = vand.u32 %v385, 2147483648
    %v445 = vsel %vm443, %v444, %v442
    %v446 = vrsqrt.pop %v386
    %v447 = vmul.f32 %v446, %v386
    %v448 = vmul.f32 %v447, %v446
    %v449 = vmul.f32 0.5, %v448
    %v450 = vsub.f32 1.5, %v449
    %v451 = vmul.f32 %v446, %v450
    %v452 = vmul.f32 %v386, %v451
    %vm453 = vcmp.eq.f32.partialorder %v386, inf
    %v454 = vsel %vm453, %v386, %v452
    %vm455 = vcmp.eq.f32.partialorder %v386, 0.0
    %v456 = vand.u32 %v386, 2147483648
    %v457 = vsel %vm455, %v456, %v454
    %v458 = vrsqrt.pop %v387
    %v459 = vmul.f32 %v458, %v387
    %v460 = vmul.f32 %v459, %v458
    %v461 = vmul.f32 0.5, %v460
    %v462 = vsub.f32 1.5, %v461
    %v463 = vmul.f32 %v458, %v462
    %v464 = vmul.f32 %v387, %v463
    %vm465 = vcmp.eq.f32.partialorder %v387, inf
    %v466 = vsel %vm465, %v387, %v464
    %vm467 = vcmp.eq.f32.partialorder %v387, 0.0
    %v468 = vand.u32 %v387, 2147483648
    %v469 = vsel %vm467, %v468, %v466
    %v470 = vrsqrt.pop %v388
    %v471 = vmul.f32 %v470, %v388
    %v472 = vmul.f32 %v471, %v470
    %v473 = vmul.f32 0.5, %v472
    %v474 = vsub.f32 1.5, %v473
    %v475 = vmul.f32 %v470, %v474
    %v476 = vmul.f32 %v388, %v475
    %vm477 = vcmp.eq.f32.partialorder %v388, inf
    %v478 = vsel %vm477, %v388, %v476
    %vm479 = vcmp.eq.f32.partialorder %v388, 0.0
    %v480 = vand.u32 %v388, 2147483648
    %v481 = vsel %vm479, %v480, %v478
    %v482 = vrsqrt.pop %v389
    %v483 = vmul.f32 %v482, %v389
    %v484 = vmul.f32 %v483, %v482
    %v485 = vmul.f32 0.5, %v484
    %v486 = vsub.f32 1.5, %v485
    %v487 = vmul.f32 %v482, %v486
    %v488 = vmul.f32 %v389, %v487
    %vm489 = vcmp.eq.f32.partialorder %v389, inf
    %v490 = vsel %vm489, %v389, %v488
    %vm491 = vcmp.eq.f32.partialorder %v389, 0.0
    %v492 = vand.u32 %v389, 2147483648
    %v493 = vsel %vm491, %v492, %v490
    %v494 = vrsqrt.pop %v390
    %v495 = vmul.f32 %v494, %v390
    %v496 = vmul.f32 %v495, %v494
    %v497 = vmul.f32 0.5, %v496
    %v498 = vsub.f32 1.5, %v497
    %v499 = vmul.f32 %v494, %v498
    %v500 = vmul.f32 %v390, %v499
    %vm501 = vcmp.eq.f32.partialorder %v390, inf
    %v502 = vsel %vm501, %v390, %v500
    %vm503 = vcmp.eq.f32.partialorder %v390, 0.0
    %v504 = vand.u32 %v390, 2147483648
    %v505 = vsel %vm503, %v504, %v502
    %v506 = vrsqrt.pop %v391
    %v507 = vmul.f32 %v506, %v391
    %v508 = vmul.f32 %v507, %v506
    %v509 = vmul.f32 0.5, %v508
    %v510 = vsub.f32 1.5, %v509
    %v511 = vmul.f32 %v506, %v510
    %v512 = vmul.f32 %v391, %v511
    %vm513 = vcmp.eq.f32.partialorder %v391, inf
    %v514 = vsel %vm513, %v391, %v512
    %vm515 = vcmp.eq.f32.partialorder %v391, 0.0
    %v516 = vand.u32 %v391, 2147483648
    %v517 = vsel %vm515, %v516, %v514
    %v518 = vrsqrt.pop %v392
    %v519 = vmul.f32 %v518, %v392
    %v520 = vmul.f32 %v519, %v518
    %v521 = vmul.f32 0.5, %v520
    %v522 = vsub.f32 1.5, %v521
    %v523 = vmul.f32 %v518, %v522
    %v524 = vmul.f32 %v392, %v523
    %vm525 = vcmp.eq.f32.partialorder %v392, inf
    %v526 = vsel %vm525, %v392, %v524
    %vm527 = vcmp.eq.f32.partialorder %v392, 0.0
    %v528 = vand.u32 %v392, 2147483648
    %v529 = vsel %vm527, %v528, %v526
    %v530 = vrsqrt.pop %v393
    %v531 = vmul.f32 %v530, %v393
    %v532 = vmul.f32 %v531, %v530
    %v533 = vmul.f32 0.5, %v532
    %v534 = vsub.f32 1.5, %v533
    %v535 = vmul.f32 %v530, %v534
    %v536 = vmul.f32 %v393, %v535
    %vm537 = vcmp.eq.f32.partialorder %v393, inf
    %v538 = vsel %vm537, %v393, %v536
    %vm539 = vcmp.eq.f32.partialorder %v393, 0.0
    %v540 = vand.u32 %v393, 2147483648
    %v541 = vsel %vm539, %v540, %v538
    %v542 = vrsqrt.pop %v394
    %v543 = vmul.f32 %v542, %v394
    %v544 = vmul.f32 %v543, %v542
    %v545 = vmul.f32 0.5, %v544
    %v546 = vsub.f32 1.5, %v545
    %v547 = vmul.f32 %v542, %v546
    %v548 = vmul.f32 %v394, %v547
    %vm549 = vcmp.eq.f32.partialorder %v394, inf
    %v550 = vsel %vm549, %v394, %v548
    %vm551 = vcmp.eq.f32.partialorder %v394, 0.0
    %v552 = vand.u32 %v394, 2147483648
    %v553 = vsel %vm551, %v552, %v550
    %v554 = vrsqrt.pop %v395
    %v555 = vmul.f32 %v554, %v395
    %v556 = vmul.f32 %v555, %v554
    %v557 = vmul.f32 0.5, %v556
    %v558 = vsub.f32 1.5, %v557
    %v559 = vmul.f32 %v554, %v558
    %v560 = vmul.f32 %v395, %v559
    %vm561 = vcmp.eq.f32.partialorder %v395, inf
    %v562 = vsel %vm561, %v395, %v560
    %vm563 = vcmp.eq.f32.partialorder %v395, 0.0
    %v564 = vand.u32 %v395, 2147483648
    %v565 = vsel %vm563, %v564, %v562
    %v566 = vrsqrt.pop %v396
    %v567 = vmul.f32 %v566, %v396
    %v568 = vmul.f32 %v567, %v566
    %v569 = vmul.f32 0.5, %v568
    %v570 = vsub.f32 1.5, %v569
    %v571 = vmul.f32 %v566, %v570
    %v572 = vmul.f32 %v396, %v571
    %vm573 = vcmp.eq.f32.partialorder %v396, inf
    %v574 = vsel %vm573, %v396, %v572
    %vm575 = vcmp.eq.f32.partialorder %v396, 0.0
    %v576 = vand.u32 %v396, 2147483648
    %v577 = vsel %vm575, %v576, %v574
    %v578 = vrsqrt.pop %v397
    %v579 = vmul.f32 %v578, %v397
    %v580 = vmul.f32 %v579, %v578
    %v581 = vmul.f32 0.5, %v580
    %v582 = vsub.f32 1.5, %v581
    %v583 = vmul.f32 %v578, %v582
    %v584 = vmul.f32 %v397, %v583
    %vm585 = vcmp.eq.f32.partialorder %v397, inf
    %v586 = vsel %vm585, %v397, %v584
    %vm587 = vcmp.eq.f32.partialorder %v397, 0.0
    %v588 = vand.u32 %v397, 2147483648
    %v589 = vsel %vm587, %v588, %v586
    %v590 = vld [vmem:[%s2] sm:$0xff]
    %v591 = vld [vmem:[%s2 + $0x8] sm:$0xff]
    %v592 = vld [vmem:[%s2 + $0x10] sm:$0xff]
    %v593 = vld [vmem:[%s2 + $0x18] sm:$0xff]
    %v594 = vld [vmem:[%s2 + $0x20] sm:$0xff]
    %v595 = vld [vmem:[%s2 + $0x28] sm:$0xff]
    %v596 = vld [vmem:[%s2 + $0x30] sm:$0xff]
    %v597 = vld [vmem:[%s2 + $0x38] sm:$0xff]
    %v598 = vld [vmem:[%s2 + $0x40] sm:$0xff]
    %v599 = vld [vmem:[%s2 + $0x48] sm:$0xff]
    %v600 = vld [vmem:[%s2 + $0x50] sm:$0xff]
    %v601 = vld [vmem:[%s2 + $0x58] sm:$0xff]
    %v602 = vld [vmem:[%s2 + $0x60] sm:$0xff]
    %v603 = vld [vmem:[%s2 + $0x68] sm:$0xff]
    %v604 = vld [vmem:[%s2 + $0x70] sm:$0xff]
    %v605 = vld [vmem:[%s2 + $0x78] sm:$0xff]
    %v606 = vld [vmem:[%s3] sm:$0x1]
    %607 = vset.pattern.permute.xlu0 0
    %608 = vperm.xlu0 %607, %v590
    %v609 = vpop.permute.xlu0 %608
    %610 = vset.pattern.permute.xlu0 0
    %611 = vperm.xlu0 %610, %v591
    %v612 = vpop.permute.xlu0 %611
    %613 = vset.pattern.permute.xlu0 0
    %614 = vperm.xlu0 %613, %v592
    %v615 = vpop.permute.xlu0 %614
    %616 = vset.pattern.permute.xlu0 0
    %617 = vperm.xlu0 %616, %v593
    %v618 = vpop.permute.xlu0 %617
    %619 = vset.pattern.permute.xlu0 0
    %620 = vperm.xlu0 %619, %v594
    %v621 = vpop.permute.xlu0 %620
    %622 = vset.pattern.permute.xlu0 0
    %623 = vperm.xlu0 %622, %v595
    %v624 = vpop.permute.xlu0 %623
    %625 = vset.pattern.permute.xlu0 0
    %626 = vperm.xlu0 %625, %v596
    %v627 = vpop.permute.xlu0 %626
    %628 = vset.pattern.permute.xlu0 0
    %629 = vperm.xlu0 %628, %v597
    %v630 = vpop.permute.xlu0 %629
    %631 = vset.pattern.permute.xlu0 0
    %632 = vperm.xlu0 %631, %v598
    %v633 = vpop.permute.xlu0 %632
    %634 = vset.pattern.permute.xlu0 0
    %635 = vperm.xlu0 %634, %v599
    %v636 = vpop.permute.xlu0 %635
    %637 = vset.pattern.permute.xlu0 0
    %638 = vperm.xlu0 %637, %v600
    %v639 = vpop.permute.xlu0 %638
    %640 = vset.pattern.permute.xlu0 0
    %641 = vperm.xlu0 %640, %v601
    %v642 = vpop.permute.xlu0 %641
    %643 = vset.pattern.permute.xlu0 0
    %644 = vperm.xlu0 %643, %v602
    %v645 = vpop.permute.xlu0 %644
    %646 = vset.pattern.permute.xlu0 0
    %647 = vperm.xlu0 %646, %v603
    %v648 = vpop.permute.xlu0 %647
    %649 = vset.pattern.permute.xlu0 0
    %650 = vperm.xlu0 %649, %v604
    %v651 = vpop.permute.xlu0 %650
    %652 = vset.pattern.permute.xlu0 0
    %653 = vperm.xlu0 %652, %v605
    %v654 = vpop.permute.xlu0 %653
    %v655 = vperm.slane %v606, 0
    %vm656 = vcmp.eq.s32.totalorder %v609, %v655
    %vm657 = vcmp.eq.s32.totalorder %v612, %v655
    %vm658 = vcmp.eq.s32.totalorder %v615, %v655
    %vm659 = vcmp.eq.s32.totalorder %v618, %v655
    %vm660 = vcmp.eq.s32.totalorder %v621, %v655
    %vm661 = vcmp.eq.s32.totalorder %v624, %v655
    %vm662 = vcmp.eq.s32.totalorder %v627, %v655
    %vm663 = vcmp.eq.s32.totalorder %v630, %v655
    %vm664 = vcmp.eq.s32.totalorder %v633, %v655
    %vm665 = vcmp.eq.s32.totalorder %v636, %v655
    %vm666 = vcmp.eq.s32.totalorder %v639, %v655
    %vm667 = vcmp.eq.s32.totalorder %v642, %v655
    %vm668 = vcmp.eq.s32.totalorder %v645, %v655
    %vm669 = vcmp.eq.s32.totalorder %v648, %v655
    %vm670 = vcmp.eq.s32.totalorder %v651, %v655
    %vm671 = vcmp.eq.s32.totalorder %v654, %v655
    %s672 = smul.u32 0, 128
    %v673 = vlaneseq
    %v674 = vshrl.u32 %v673, 7
    %v675 = vadd.s32 %v674, 8
    %v676 = vadd.s32 %v674, 16
    %v677 = vadd.s32 %v674, 24
    %v678 = vadd.s32 %v674, 32
    %v679 = vadd.s32 %v674, 40
    %v680 = vadd.s32 %v674, 48
    %v681 = vadd.s32 %v674, 56
    %v682 = vadd.s32 %v674, 64
    %v683 = vadd.s32 %v674, 72
    %v684 = vadd.s32 %v674, 80
    %v685 = vadd.s32 %v674, 88
    %v686 = vadd.s32 %v674, 96
    %v687 = vadd.s32 %v674, 104
    %v688 = vadd.s32 %v674, 112
    %v689 = vadd.s32 %v674, 120
    %v690 = vstv %s672
    %v691 = vadd.s32 %v690, %v674
    %v692 = vadd.s32 %v690, %v675
    %v693 = vadd.s32 %v690, %v676
    %v694 = vadd.s32 %v690, %v677
    %v695 = vadd.s32 %v690, %v678
    %v696 = vadd.s32 %v690, %v679
    %v697 = vadd.s32 %v690, %v680
    %v698 = vadd.s32 %v690, %v681
    %v699 = vadd.s32 %v690, %v682
    %v700 = vadd.s32 %v690, %v683
    %v701 = vadd.s32 %v690, %v684
    %v702 = vadd.s32 %v690, %v685
    %v703 = vadd.s32 %v690, %v686
    %v704 = vadd.s32 %v690, %v687
    %v705 = vadd.s32 %v690, %v688
    %v706 = vadd.s32 %v690, %v689
    %s707 = smul.u32 0, 128
    %v708 = vlaneseq
    %v709 = vand.u32 %v708, 127
    %v710 = vstv %s707
    %v711 = vadd.s32 %v710, %v709
    %vm712 = vcmp.eq.s32.totalorder %v691, %v711
    %vm713 = vcmp.eq.s32.totalorder %v692, %v711
    %vm714 = vcmp.eq.s32.totalorder %v693, %v711
    %vm715 = vcmp.eq.s32.totalorder %v694, %v711
    %vm716 = vcmp.eq.s32.totalorder %v695, %v711
    %vm717 = vcmp.eq.s32.totalorder %v696, %v711
    %vm718 = vcmp.eq.s32.totalorder %v697, %v711
    %vm719 = vcmp.eq.s32.totalorder %v698, %v711
    %vm720 = vcmp.eq.s32.totalorder %v699, %v711
    %vm721 = vcmp.eq.s32.totalorder %v700, %v711
    %vm722 = vcmp.eq.s32.totalorder %v701, %v711
    %vm723 = vcmp.eq.s32.totalorder %v702, %v711
    %vm724 = vcmp.eq.s32.totalorder %v703, %v711
    %vm725 = vcmp.eq.s32.totalorder %v704, %v711
    %vm726 = vcmp.eq.s32.totalorder %v705, %v711
    %vm727 = vcmp.eq.s32.totalorder %v706, %v711
    %vm728 = vcmp.le.f32.partialorder %v409, 1.5
    %vm729 = vcmp.le.f32.partialorder %v421, 1.5
    %vm730 = vcmp.le.f32.partialorder %v433, 1.5
    %vm731 = vcmp.le.f32.partialorder %v445, 1.5
    %vm732 = vcmp.le.f32.partialorder %v457, 1.5
    %vm733 = vcmp.le.f32.partialorder %v469, 1.5
    %vm734 = vcmp.le.f32.partialorder %v481, 1.5
    %vm735 = vcmp.le.f32.partialorder %v493, 1.5
    %vm736 = vcmp.le.f32.partialorder %v505, 1.5
    %vm737 = vcmp.le.f32.partialorder %v517, 1.5
    %vm738 = vcmp.le.f32.partialorder %v529, 1.5
    %vm739 = vcmp.le.f32.partialorder %v541, 1.5
    %vm740 = vcmp.le.f32.partialorder %v553, 1.5
    %vm741 = vcmp.le.f32.partialorder %v565, 1.5
    %vm742 = vcmp.le.f32.partialorder %v577, 1.5
    %vm743 = vcmp.le.f32.partialorder %v589, 1.5
    %vm744 = vmand %vm656, %vm728
    %vm745 = vmand %vm657, %vm729
    %vm746 = vmand %vm658, %vm730
    %vm747 = vmand %vm659, %vm731
    %vm748 = vmand %vm660, %vm732
    %vm749 = vmand %vm661, %vm733
    %vm750 = vmand %vm662, %vm734
    %vm751 = vmand %vm663, %vm735
    %vm752 = vmand %vm664, %vm736
    %vm753 = vmand %vm665, %vm737
    %vm754 = vmand %vm666, %vm738
    %vm755 = vmand %vm667, %vm739
    %vm756 = vmand %vm668, %vm740
    %vm757 = vmand %vm669, %vm741
    %vm758 = vmand %vm670, %vm742
    %vm759 = vmand %vm671, %vm743
    %vm760 = vmxor %vm712, 1
    %vm761 = vmxor %vm713, 1
    %vm762 = vmxor %vm714, 1
    %vm763 = vmxor %vm715, 1
    %vm764 = vmxor %vm716, 1
    %vm765 = vmxor %vm717, 1
    %vm766 = vmxor %vm718, 1
    %vm767 = vmxor %vm719, 1
    %vm768 = vmxor %vm720, 1
    %vm769 = vmxor %vm721, 1
    %vm770 = vmxor %vm722, 1
    %vm771 = vmxor %vm723, 1
    %vm772 = vmxor %vm724, 1
    %vm773 = vmxor %vm725, 1
    %vm774 = vmxor %vm726, 1
    %vm775 = vmxor %vm727, 1
    %vm776 = vmand %vm744, %vm760
    %vm777 = vmand %vm745, %vm761
    %vm778 = vmand %vm746, %vm762
    %vm779 = vmand %vm747, %vm763
    %vm780 = vmand %vm748, %vm764
    %vm781 = vmand %vm749, %vm765
    %vm782 = vmand %vm750, %vm766
    %vm783 = vmand %vm751, %vm767
    %vm784 = vmand %vm752, %vm768
    %vm785 = vmand %vm753, %vm769
    %vm786 = vmand %vm754, %vm770
    %vm787 = vmand %vm755, %vm771
    %vm788 = vmand %vm756, %vm772
    %vm789 = vmand %vm757, %vm773
    %vm790 = vmand %vm758, %vm774
    %vm791 = vmand %vm759, %vm775
    %v792 = vsel %vm776, 1, 0
    %v793 = vsel %vm777, 1, 0
    %v794 = vsel %vm778, 1, 0
    %v795 = vsel %vm779, 1, 0
    %v796 = vsel %vm780, 1, 0
    %v797 = vsel %vm781, 1, 0
    %v798 = vsel %vm782, 1, 0
    %v799 = vsel %vm783, 1, 0
    %v800 = vsel %vm784, 1, 0
    %v801 = vsel %vm785, 1, 0
    %v802 = vsel %vm786, 1, 0
    %v803 = vsel %vm787, 1, 0
    %v804 = vsel %vm788, 1, 0
    %v805 = vsel %vm789, 1, 0
    %v806 = vsel %vm790, 1, 0
    %v807 = vsel %vm791, 1, 0
    %v808 = vcvt.s32.f32 %v792
    %v809 = vcvt.s32.f32 %v793
    %v810 = vcvt.s32.f32 %v794
    %v811 = vcvt.s32.f32 %v795
    %v812 = vcvt.s32.f32 %v796
    %v813 = vcvt.s32.f32 %v797
    %v814 = vcvt.s32.f32 %v798
    %v815 = vcvt.s32.f32 %v799
    %v816 = vcvt.s32.f32 %v800
    %v817 = vcvt.s32.f32 %v801
    %v818 = vcvt.s32.f32 %v802
    %v819 = vcvt.s32.f32 %v803
    %v820 = vcvt.s32.f32 %v804
    %v821 = vcvt.s32.f32 %v805
    %v822 = vcvt.s32.f32 %v806
    %v823 = vcvt.s32.f32 %v807
    %v824 = vpack.c.bf16 %v809, %v808
    %v825 = vpack.c.bf16 %v811, %v810
    %v826 = vpack.c.bf16 %v813, %v812
    %v827 = vpack.c.bf16 %v815, %v814
    %v828 = vpack.c.bf16 %v817, %v816
    %v829 = vpack.c.bf16 %v819, %v818
    %v830 = vpack.c.bf16 %v821, %v820
    %v831 = vpack.c.bf16 %v823, %v822
    %v832 = vld [vmem:[#allocation2] sm:$0xff]
    %v833 = vld [vmem:[#allocation2 + $0x8] sm:$0xff]
    %v834 = vld [vmem:[#allocation2 + $0x10] sm:$0xff]
    %v835 = vld [vmem:[#allocation2 + $0x18] sm:$0xff]
    %v836 = vld [vmem:[#allocation2 + $0x20] sm:$0xff]
    %v837 = vld [vmem:[#allocation2 + $0x28] sm:$0xff]
    %v838 = vld [vmem:[#allocation2 + $0x30] sm:$0xff]
    %v839 = vld [vmem:[#allocation2 + $0x38] sm:$0xff]
    %v840 = vld [vmem:[#allocation2 + $0x40] sm:$0xff]
    %v841 = vld [vmem:[#allocation2 + $0x48] sm:$0xff]
    %v842 = vld [vmem:[#allocation2 + $0x50] sm:$0xff]
    %v843 = vld [vmem:[#allocation2 + $0x58] sm:$0xff]
    %v844 = vld [vmem:[#allocation2 + $0x60] sm:$0xff]
    %v845 = vld [vmem:[#allocation2 + $0x68] sm:$0xff]
    %v846 = vld [vmem:[#allocation2 + $0x70] sm:$0xff]
    %v847 = vld [vmem:[#allocation2 + $0x78] sm:$0xff]
    %v848 = vld [vmem:[%s4] sm:$0xf]
    %v849 = vld [vmem:[%s4 + $0x4] sm:$0xf]
    %v850 = vld [vmem:[%s4 + $0x8] sm:$0xf]
    %v851 = vld [vmem:[%s4 + $0xc] sm:$0xf]
    %v852 = vld [vmem:[%s4 + $0x10] sm:$0xf]
    %v853 = vld [vmem:[%s4 + $0x14] sm:$0xf]
    %v854 = vld [vmem:[%s4 + $0x18] sm:$0xf]
    %v855 = vld [vmem:[%s4 + $0x1c] sm:$0xf]
    %v856 = vld [vmem:[%s4 + $0x20] sm:$0xf]
    %v857 = vld [vmem:[%s4 + $0x24] sm:$0xf]
    %v858 = vld [vmem:[%s4 + $0x28] sm:$0xf]
    %v859 = vld [vmem:[%s4 + $0x2c] sm:$0xf]
    %v860 = vld [vmem:[%s4 + $0x30] sm:$0xf]
    %v861 = vld [vmem:[%s4 + $0x34] sm:$0xf]
    %v862 = vld [vmem:[%s4 + $0x38] sm:$0xf]
    %v863 = vld [vmem:[%s4 + $0x3c] sm:$0xf]
    %v880 = vunpack.c.l.b16 %v848
    %v881 = vunpack.c.l.b16 %v849
    %v882 = vunpack.c.l.b16 %v850
    %v883 = vunpack.c.l.b16 %v851
    %v884 = vunpack.c.l.b16 %v852
    %v885 = vunpack.c.l.b16 %v853
    %v886 = vunpack.c.l.b16 %v854
    %v887 = vunpack.c.l.b16 %v855
    %v888 = vunpack.c.l.b16 %v856
    %v889 = vunpack.c.l.b16 %v857
    %v890 = vunpack.c.l.b16 %v858
    %v891 = vunpack.c.l.b16 %v859
    %v892 = vunpack.c.l.b16 %v860
    %v893 = vunpack.c.l.b16 %v861
    %v894 = vunpack.c.l.b16 %v862
    %v895 = vunpack.c.l.b16 %v863
    %v896 = vpack.c.b16 %v881, %v880
    %v897 = vpack.c.b16 %v883, %v882
    %v898 = vpack.c.b16 %v885, %v884
    %v899 = vpack.c.b16 %v887, %v886
    %v900 = vpack.c.b16 %v889, %v888
    %v901 = vpack.c.b16 %v891, %v890
    %v902 = vpack.c.b16 %v893, %v892
    %v903 = vpack.c.b16 %v895, %v894
    %912 = vmatpush.bf16.msra.mxu0 %v903
    %913 = vmatpush.bf16.msra.mxu0 %v902
    %914 = vmatpush.bf16.msra.mxu0 %v901
    %915 = vmatpush.bf16.msra.mxu0 %v900
    %916 = vmatpush.bf16.msra.mxu0 %v899
    %917 = vmatpush.bf16.msra.mxu0 %v898
    %918 = vmatpush.bf16.msra.mxu0 %v897
    %919 = vmatpush.bf16.msra.mxu0 %v896
    %920 = vmatmul.bf16.gmra.mxu0 %v824
    %v921 = vpop.f32.mrf.mxu0
    %v922 = vadd.f32 0.0, %v921
    %v923 = vpop.f32.mrf.mxu0
    %v924 = vadd.f32 0.0, %v923
    %925 = vmatmul.bf16.gmra.mxu0 %v825
    %v926 = vpop.f32.mrf.mxu0
    %v927 = vadd.f32 0.0, %v926
    %v928 = vpop.f32.mrf.mxu0
    %v929 = vadd.f32 0.0, %v928
    %930 = vmatmul.bf16.gmra.mxu0 %v826
    %v931 = vpop.f32.mrf.mxu0
    %v932 = vadd.f32 0.0, %v931
    %v933 = vpop.f32.mrf.mxu0
    %v934 = vadd.f32 0.0, %v933
    %935 = vmatmul.bf16.gmra.mxu0 %v827
    %v936 = vpop.f32.mrf.mxu0
    %v937 = vadd.f32 0.0, %v936
    %v938 = vpop.f32.mrf.mxu0
    %v939 = vadd.f32 0.0, %v938
    %940 = vmatmul.bf16.gmra.mxu0 %v828
    %v941 = vpop.f32.mrf.mxu0
    %v942 = vadd.f32 0.0, %v941
    %v943 = vpop.f32.mrf.mxu0
    %v944 = vadd.f32 0.0, %v943
    %945 = vmatmul.bf16.gmra.mxu0 %v829
    %v946 = vpop.f32.mrf.mxu0
    %v947 = vadd.f32 0.0, %v946
    %v948 = vpop.f32.mrf.mxu0
    %v949 = vadd.f32 0.0, %v948
    %950 = vmatmul.bf16.gmra.mxu0 %v830
    %v951 = vpop.f32.mrf.mxu0
    %v952 = vadd.f32 0.0, %v951
    %v953 = vpop.f32.mrf.mxu0
    %v954 = vadd.f32 0.0, %v953
    %955 = vmatmul.bf16.gmra.mxu0 %v831
    %v956 = vpop.f32.mrf.mxu0
    %v957 = vadd.f32 0.0, %v956
    %v958 = vpop.f32.mrf.mxu0
    %v959 = vadd.f32 0.0, %v958
    %960 = vdwg.mxu0
    %962 = vset.pattern.permute.xlu0 0
    %963 = vperm.xlu0 %962, %v832
    %v964 = vpop.permute.xlu0 %963
    %967 = vset.pattern.permute.xlu0 0
    %968 = vperm.xlu0 %967, %v833
    %v969 = vpop.permute.xlu0 %968
    %972 = vset.pattern.permute.xlu0 0
    %973 = vperm.xlu0 %972, %v834
    %v974 = vpop.permute.xlu0 %973
    %977 = vset.pattern.permute.xlu0 0
    %978 = vperm.xlu0 %977, %v835
    %v979 = vpop.permute.xlu0 %978
    %982 = vset.pattern.permute.xlu0 0
    %983 = vperm.xlu0 %982, %v836
    %v984 = vpop.permute.xlu0 %983
    %987 = vset.pattern.permute.xlu0 0
    %988 = vperm.xlu0 %987, %v837
    %v989 = vpop.permute.xlu0 %988
    %992 = vset.pattern.permute.xlu0 0
    %993 = vperm.xlu0 %992, %v838
    %v994 = vpop.permute.xlu0 %993
    %997 = vset.pattern.permute.xlu0 0
    %998 = vperm.xlu0 %997, %v839
    %v999 = vpop.permute.xlu0 %998
    %1002 = vset.pattern.permute.xlu0 0
    %1003 = vperm.xlu0 %1002, %v840
    %v1004 = vpop.permute.xlu0 %1003
    %1007 = vset.pattern.permute.xlu0 0
    %1008 = vperm.xlu0 %1007, %v841
    %v1009 = vpop.permute.xlu0 %1008
    %1012 = vset.pattern.permute.xlu0 0
    %1013 = vperm.xlu0 %1012, %v842
    %v1014 = vpop.permute.xlu0 %1013
    %1017 = vset.pattern.permute.xlu0 0
    %1018 = vperm.xlu0 %1017, %v843
    %v1019 = vpop.permute.xlu0 %1018
    %1022 = vset.pattern.permute.xlu0 0
    %1023 = vperm.xlu0 %1022, %v844
    %v1024 = vpop.permute.xlu0 %1023
    %1027 = vset.pattern.permute.xlu0 0
    %1028 = vperm.xlu0 %1027, %v845
    %v1029 = vpop.permute.xlu0 %1028
    %1032 = vset.pattern.permute.xlu0 0
    %1033 = vperm.xlu0 %1032, %v846
    %v1034 = vpop.permute.xlu0 %1033
    %1037 = vset.pattern.permute.xlu0 0
    %1038 = vperm.xlu0 %1037, %v847
    %v1039 = vpop.permute.xlu0 %1038
    %v1041 = vadd.f32 %v964, %v922
    %v1042 = vadd.f32 %v969, %v924
    %v1043 = vadd.f32 %v974, %v927
    %v1044 = vadd.f32 %v979, %v929
    %v1045 = vadd.f32 %v984, %v932
    %v1046 = vadd.f32 %v989, %v934
    %v1047 = vadd.f32 %v994, %v937
    %v1048 = vadd.f32 %v999, %v939
    %v1049 = vadd.f32 %v1004, %v942
    %v1050 = vadd.f32 %v1009, %v944
    %v1051 = vadd.f32 %v1014, %v947
    %v1052 = vadd.f32 %v1019, %v949
    %v1053 = vadd.f32 %v1024, %v952
    %v1054 = vadd.f32 %v1029, %v954
    %v1055 = vadd.f32 %v1034, %v957
    %v1056 = vadd.f32 %v1039, %v959
    %vm1057 = vcmp.le.f32.partialorder %v1041, 33.0
    %vm1058 = vcmp.le.f32.partialorder %v1042, 33.0
    %vm1059 = vcmp.le.f32.partialorder %v1043, 33.0
    %vm1060 = vcmp.le.f32.partialorder %v1044, 33.0
    %vm1061 = vcmp.le.f32.partialorder %v1045, 33.0
    %vm1062 = vcmp.le.f32.partialorder %v1046, 33.0
    %vm1063 = vcmp.le.f32.partialorder %v1047, 33.0
    %vm1064 = vcmp.le.f32.partialorder %v1048, 33.0
    %vm1065 = vcmp.le.f32.partialorder %v1049, 33.0
    %vm1066 = vcmp.le.f32.partialorder %v1050, 33.0
    %vm1067 = vcmp.le.f32.partialorder %v1051, 33.0
    %vm1068 = vcmp.le.f32.partialorder %v1052, 33.0
    %vm1069 = vcmp.le.f32.partialorder %v1053, 33.0
    %vm1070 = vcmp.le.f32.partialorder %v1054, 33.0
    %vm1071 = vcmp.le.f32.partialorder %v1055, 33.0
    %vm1072 = vcmp.le.f32.partialorder %v1056, 33.0
    %vm1073 = vmand %vm776, %vm1057
    %vm1074 = vmand %vm777, %vm1058
    %vm1075 = vmand %vm778, %vm1059
    %vm1076 = vmand %vm779, %vm1060
    %vm1077 = vmand %vm780, %vm1061
    %vm1078 = vmand %vm781, %vm1062
    %vm1079 = vmand %vm782, %vm1063
    %vm1080 = vmand %vm783, %vm1064
    %vm1081 = vmand %vm784, %vm1065
    %vm1082 = vmand %vm785, %vm1066
    %vm1083 = vmand %vm786, %vm1067
    %vm1084 = vmand %vm787, %vm1068
    %vm1085 = vmand %vm788, %vm1069
    %vm1086 = vmand %vm789, %vm1070
    %vm1087 = vmand %vm790, %vm1071
    %vm1088 = vmand %vm791, %vm1072
    %1089 = vadd.xlane.f32.xlu0 %v808
    %v1090 = vpop.xlane.xlu0 %1089
    %1091 = vadd.xlane.f32.xlu0 %v809
    %v1092 = vpop.xlane.xlu0 %1091
    %1093 = vadd.xlane.f32.xlu0 %v810
    %v1094 = vpop.xlane.xlu0 %1093
    %1095 = vadd.xlane.f32.xlu0 %v811
    %v1096 = vpop.xlane.xlu0 %1095
    %1097 = vadd.xlane.f32.xlu0 %v812
    %v1098 = vpop.xlane.xlu0 %1097
    %1099 = vadd.xlane.f32.xlu0 %v813
    %v1100 = vpop.xlane.xlu0 %1099
    %1101 = vadd.xlane.f32.xlu0 %v814
    %v1102 = vpop.xlane.xlu0 %1101
    %1103 = vadd.xlane.f32.xlu0 %v815
    %v1104 = vpop.xlane.xlu0 %1103
    %1105 = vadd.xlane.f32.xlu0 %v816
    %v1106 = vpop.xlane.xlu0 %1105
    %1107 = vadd.xlane.f32.xlu0 %v817
    %v1108 = vpop.xlane.xlu0 %1107
    %1109 = vadd.xlane.f32.xlu0 %v818
    %v1110 = vpop.xlane.xlu0 %1109
    %1111 = vadd.xlane.f32.xlu0 %v819
    %v1112 = vpop.xlane.xlu0 %1111
    %1113 = vadd.xlane.f32.xlu0 %v820
    %v1114 = vpop.xlane.xlu0 %1113
    %1115 = vadd.xlane.f32.xlu0 %v821
    %v1116 = vpop.xlane.xlu0 %1115
    %1117 = vadd.xlane.f32.xlu0 %v822
    %v1118 = vpop.xlane.xlu0 %1117
    %1119 = vadd.xlane.f32.xlu0 %v823
    %v1120 = vpop.xlane.xlu0 %1119
    %v1121 = vadd.f32 %v832, %v1090
    %v1122 = vadd.f32 %v833, %v1092
    %v1123 = vadd.f32 %v834, %v1094
    %v1124 = vadd.f32 %v835, %v1096
    %v1125 = vadd.f32 %v836, %v1098
    %v1126 = vadd.f32 %v837, %v1100
    %v1127 = vadd.f32 %v838, %v1102
    %v1128 = vadd.f32 %v839, %v1104
    %v1129 = vadd.f32 %v840, %v1106
    %v1130 = vadd.f32 %v841, %v1108
    %v1131 = vadd.f32 %v842, %v1110
    %v1132 = vadd.f32 %v843, %v1112
    %v1133 = vadd.f32 %v844, %v1114
    %v1134 = vadd.f32 %v845, %v1116
    %v1135 = vadd.f32 %v846, %v1118
    %v1136 = vadd.f32 %v847, %v1120
    %vm1137 = vcmask 7168
    %1138 = vst.msk [vmem:[#allocation2] sm:$0xff] %vm1137, %v1121
    %1139 = vst.msk [vmem:[#allocation2 + $0x8] sm:$0xff] %vm1137, %v1122
    %1140 = vst.msk [vmem:[#allocation2 + $0x10] sm:$0xff] %vm1137, %v1123
    %1141 = vst.msk [vmem:[#allocation2 + $0x18] sm:$0xff] %vm1137, %v1124
    %1142 = vst.msk [vmem:[#allocation2 + $0x20] sm:$0xff] %vm1137, %v1125
    %1143 = vst.msk [vmem:[#allocation2 + $0x28] sm:$0xff] %vm1137, %v1126
    %1144 = vst.msk [vmem:[#allocation2 + $0x30] sm:$0xff] %vm1137, %v1127
    %1145 = vst.msk [vmem:[#allocation2 + $0x38] sm:$0xff] %vm1137, %v1128
    %1146 = vst.msk [vmem:[#allocation2 + $0x40] sm:$0xff] %vm1137, %v1129
    %1147 = vst.msk [vmem:[#allocation2 + $0x48] sm:$0xff] %vm1137, %v1130
    %1148 = vst.msk [vmem:[#allocation2 + $0x50] sm:$0xff] %vm1137, %v1131
    %1149 = vst.msk [vmem:[#allocation2 + $0x58] sm:$0xff] %vm1137, %v1132
    %1150 = vst.msk [vmem:[#allocation2 + $0x60] sm:$0xff] %vm1137, %v1133
    %1151 = vst.msk [vmem:[#allocation2 + $0x68] sm:$0xff] %vm1137, %v1134
    %1152 = vst.msk [vmem:[#allocation2 + $0x70] sm:$0xff] %vm1137, %v1135
    %1153 = vst.msk [vmem:[#allocation2 + $0x78] sm:$0xff] %vm1137, %v1136
    %vm1154 = vcmp.ge.f32.partialorder %v409, 0.0
    %vm1155 = vcmp.ge.f32.partialorder %v421, 0.0
    %vm1156 = vcmp.ge.f32.partialorder %v433, 0.0
    %vm1157 = vcmp.ge.f32.partialorder %v445, 0.0
    %vm1158 = vcmp.ge.f32.partialorder %v457, 0.0
    %vm1159 = vcmp.ge.f32.partialorder %v469, 0.0
    %vm1160 = vcmp.ge.f32.partialorder %v481, 0.0
    %vm1161 = vcmp.ge.f32.partialorder %v493, 0.0
    %vm1162 = vcmp.ge.f32.partialorder %v505, 0.0
    %vm1163 = vcmp.ge.f32.partialorder %v517, 0.0
    %vm1164 = vcmp.ge.f32.partialorder %v529, 0.0
    %vm1165 = vcmp.ge.f32.partialorder %v541, 0.0
    %vm1166 = vcmp.ge.f32.partialorder %v553, 0.0
    %vm1167 = vcmp.ge.f32.partialorder %v565, 0.0
    %vm1168 = vcmp.ge.f32.partialorder %v577, 0.0
    %vm1169 = vcmp.ge.f32.partialorder %v589, 0.0
    %vm1170 = vmand %vm1073, %vm1154
    %vm1171 = vmand %vm1074, %vm1155
    %vm1172 = vmand %vm1075, %vm1156
    %vm1173 = vmand %vm1076, %vm1157
    %vm1174 = vmand %vm1077, %vm1158
    %vm1175 = vmand %vm1078, %vm1159
    %vm1176 = vmand %vm1079, %vm1160
    %vm1177 = vmand %vm1080, %vm1161
    %vm1178 = vmand %vm1081, %vm1162
    %vm1179 = vmand %vm1082, %vm1163
    %vm1180 = vmand %vm1083, %vm1164
    %vm1181 = vmand %vm1084, %vm1165
    %vm1182 = vmand %vm1085, %vm1166
    %vm1183 = vmand %vm1086, %vm1167
    %vm1184 = vmand %vm1087, %vm1168
    %vm1185 = vmand %vm1088, %vm1169
    %v1186 = vsel %vm1170, %v409, -1.0
    %v1187 = vsel %vm1171, %v421, -1.0
    %v1188 = vsel %vm1172, %v433, -1.0
    %v1189 = vsel %vm1173, %v445, -1.0
    %v1190 = vsel %vm1174, %v457, -1.0
    %v1191 = vsel %vm1175, %v469, -1.0
    %v1192 = vsel %vm1176, %v481, -1.0
    %v1193 = vsel %vm1177, %v493, -1.0
    %v1194 = vsel %vm1178, %v505, -1.0
    %v1195 = vsel %vm1179, %v517, -1.0
    %v1196 = vsel %vm1180, %v529, -1.0
    %v1197 = vsel %vm1181, %v541, -1.0
    %v1198 = vsel %vm1182, %v553, -1.0
    %v1199 = vsel %vm1183, %v565, -1.0
    %v1200 = vsel %vm1184, %v577, -1.0
    %v1201 = vsel %vm1185, %v589, -1.0
    %1202 = vst [vmem:[#allocation3] sm:$0xff] %v1186
    %1203 = vst [vmem:[#allocation3 + $0x8] sm:$0xff] %v1187
    %1204 = vst [vmem:[#allocation3 + $0x10] sm:$0xff] %v1188
    %1205 = vst [vmem:[#allocation3 + $0x18] sm:$0xff] %v1189
    %1206 = vst [vmem:[#allocation3 + $0x20] sm:$0xff] %v1190
    %1207 = vst [vmem:[#allocation3 + $0x28] sm:$0xff] %v1191
    %1208 = vst [vmem:[#allocation3 + $0x30] sm:$0xff] %v1192
    %1209 = vst [vmem:[#allocation3 + $0x38] sm:$0xff] %v1193
    %1210 = vst [vmem:[#allocation3 + $0x40] sm:$0xff] %v1194
    %1211 = vst [vmem:[#allocation3 + $0x48] sm:$0xff] %v1195
    %1212 = vst [vmem:[#allocation3 + $0x50] sm:$0xff] %v1196
    %1213 = vst [vmem:[#allocation3 + $0x58] sm:$0xff] %v1197
    %1214 = vst [vmem:[#allocation3 + $0x60] sm:$0xff] %v1198
    %1215 = vst [vmem:[#allocation3 + $0x68] sm:$0xff] %v1199
    %1216 = vst [vmem:[#allocation3 + $0x70] sm:$0xff] %v1200
    %1217 = vst [vmem:[#allocation3 + $0x78] sm:$0xff] %v1201
    // Predicated region
    $region26: #{tpu_custom_call.1} parent=1 // pred_check
      _
    $region27: #{tpu_custom_call.1} parent=1 // pred_check_branch
      %1219 = sbr.rel (0) target = $region29
    $region28: #{tpu_custom_call.1} parent=1 // pred_region
      %1221 = vsyncadd [#allocation4], 0
      %s1222 = sshll.u32 [#allocation3], 4
      %s1223 = int_to_ptr.vmem [resolvable:$true] %s1222
      %s1224 = sshll.u32 %s5, 4
      %s1225 = int_to_ptr.hbm [resolvable:$true] %s1224
      %1230 = dma.vmem_to_hbm [thread:$0]  %s1223, 2048, %s1225, [#allocation4], 128, 128, 8
    $region29: #{tpu_custom_call.1} parent=1 // pred_fallthru
      _
    // Predicated region
    $region30: #{tpu_custom_call.1} parent=1 // pred_check
      _
    $region31: #{tpu_custom_call.1} parent=1 // pred_check_branch
      %1232 = sbr.rel (0) target = $region33
    $region32: #{tpu_custom_call.1} parent=1 // pred_region
      %1234 = dma.done [#allocation4], 2048
    $region33: #{tpu_custom_call.1} parent=1 // pred_fallthru
      _
    %1235 = vsyncpa [#allocation4], 1

</llo_original>
